<compile_context>
chip_gen: v7x
topology: tpu7x:2x2x1
jax: 0.10.0
libtpu: 0.0.40
codegen_flags: <defaults>
</compile_context>

<pallas_src>
import functools

import jax
import jax.numpy as jnp
from jax.experimental import pallas as pl
from jax.experimental.pallas import tpu as pltpu
from jax.scipy.linalg import block_diag


def _round_up(a, m):
    return (a + m - 1) // m * m


def _mxu_lane_width():
    """256 on v6e/v7x (2x256^2 MXU), 128 on v5e and older."""
    try:
        kind = jax.devices()[0].device_kind.lower()
    except Exception:
        return 128
    if "v6" in kind or "v7" in kind:
        return 256
    return 128


# ----------------------------------------------------------------------------
# Kernel: [Linear -> ReLU]*(n_linear-1) -> Linear -> LayerNorm, row-packed.
# ----------------------------------------------------------------------------
def _fused_mlp_kernel(n_linear, sid_ref, x_ref, g_ref, *refs):
    """refs = (w0, b0, ..., w_{L-1}, b_{L-1}, gamma, beta, out_ref).

    `pack` logical rows (each `width` output features) are packed into one
    physical lane-dense row of pack*width lanes; weights are block-diagonal
    (built in the wrapper).  g_ref is the (pw, pw) block-diagonal group
    averaging matrix (ones/width) used for per-logical-row LayerNorm stats.
    """
    del sid_ref  # set selection happens entirely in the BlockSpec index_maps
    out_ref = refs[-1]
    prm = refs[:-1]

    h = x_ref[...]                                    # (Rp, pack*Dp) bf16
    a = None
    for l in range(n_linear):
        w = prm[2 * l][0]                             # (pack*K_l, pack*width) bf16
        b = prm[2 * l + 1][0]                         # (1, pack*width) f32
        a = jnp.dot(h, w, preferred_element_type=jnp.float32) + b
        if l < n_linear - 1:
            h = jnp.maximum(a, 0.0).astype(jnp.bfloat16)   # ReLU + bf16 for next dot

    gamma = prm[-2][0]                                # (1, pack*width) f32
    beta = prm[-1][0]                                 # (1, pack*width) f32

    # Per-logical-row LayerNorm stats via one full-width matmul per statistic.
    g = g_ref[...]                                    # (pw, pw) f32, block-diag 1/width
    mean = jnp.dot(a, g, preferred_element_type=jnp.float32)
    cen = a - mean
    var = jnp.dot(cen * cen, g, preferred_element_type=jnp.float32)

    normed = cen * jax.lax.rsqrt(var + 1e-5)          # torch LayerNorm eps
    out_ref[...] = (normed * gamma + beta).astype(out_ref.dtype)


# ----------------------------------------------------------------------------
# Wrapper helpers.
# ----------------------------------------------------------------------------
def _vmem_bytes_per_step(rp, pack, dp, width, n_linear):
    pw = pack * width
    x_blk = rp * pack * dp * 2                        # bf16 input block
    o_blk = rp * pw * 4                               # f32 output block
    g_blk = pw * pw * 4                               # group-averaging matrix
    p_blk = 0
    for l in range(n_linear):
        k = pack * (dp if l == 0 else width)
        p_blk += k * pw * 2 + pw * 4                  # weight (bf16) + bias (f32)
    p_blk += 2 * pw * 4                               # gamma, beta
    return 2 * (x_blk + o_blk + g_blk + p_blk)        # double-buffered pipeline


def _pick_tile(rows, pack, dp, width, n_linear, tile_rows):
    """Largest logical-row tile with modest per-set padding waste + VMEM fit."""
    min_tile = 16 * pack                              # keeps bf16/f32 tiling legal
    cap = _round_up(max(min_tile, min(tile_rows, max(rows))), min_tile)
    budget = 16 * 2 ** 20
    while (cap > min_tile and
           _vmem_bytes_per_step(cap // pack, pack, dp, width, n_linear) > budget):
        cap = max(min_tile, _round_up(cap // 2, min_tile))

    total = sum(rows)
    allowed_waste = max(total // 4, len(rows) * min_tile)
    best = min_tile
    t = min_tile
    while t <= cap:
        waste = sum(_round_up(r, t) - r for r in rows)
        if waste <= allowed_waste:
            best = t
        t *= 2
    # Keep >= 2 grid blocks so the "parallel" axis can split across 2 TCs (v7x).
    while best > min_tile and sum(_round_up(r, best) // best for r in rows) < 2:
        best = max(min_tile, best // 2)
    return best


# ----------------------------------------------------------------------------
# Wrapper: one pallas_call over all sets.
# ----------------------------------------------------------------------------
@functools.partial(
    jax.jit, static_argnames=("n_linear", "pack", "width", "dp", "tile_rows"))
def _fused_mlp_forward(features, flat_params, gmat, *, n_linear, pack, width,
                       dp, tile_rows=4096):
    rows = [int(f.shape[0]) for f in features]
    tile = _pick_tile(rows, pack, dp, width, n_linear, tile_rows)

    # Single-pass bf16 staging: pad rows to a tile multiple, pad features to dp.
    padded, set_ids = [], []
    for s, f in enumerate(features):
        r = f.shape[0]
        rp_rows = _round_up(r, tile)
        buf = jnp.zeros((rp_rows, dp), jnp.bfloat16)
        buf = buf.at[:r, :f.shape[1]].set(f.astype(jnp.bfloat16))
        padded.append(buf)
        set_ids.extend([s] * (rp_rows // tile))
    x_packed = jnp.concatenate(padded, axis=0).reshape(-1, pack * dp)
    total = x_packed.shape[0] * pack                  # total padded logical rows
    num_blocks = total // tile
    set_ids = jnp.asarray(set_ids, jnp.int32)

    rp = tile // pack                                 # physical rows per block
    pw = pack * width

    x_spec = pl.BlockSpec((rp, pack * dp), lambda i, sid: (i, 0))
    g_spec = pl.BlockSpec((pw, pw), lambda i, sid: (0, 0))        # resident
    out_spec = pl.BlockSpec((rp, pw), lambda i, sid: (i, 0))
    # Per-step weight selection via the scalar-prefetched set-id table; blocks
    # that reuse the previous step's set skip the re-copy automatically.
    param_specs = [
        pl.BlockSpec((1,) + p.shape[1:], lambda i, sid: (sid[i], 0, 0))
        for p in flat_params
    ]

    per_step = _vmem_bytes_per_step(rp, pack, dp, width, n_linear)
    vmem_limit = int(min(96 * 2 ** 20, max(8 * 2 ** 20, 4 * per_step)))

    mlp_flops = 2 * total * (dp * width + (n_linear - 1) * width * width)
    ln_flops = 2 * 2 * (total // pack) * pw * pw
    param_bytes = sum(int(p.size) * p.dtype.itemsize for p in flat_params)
    bytes_accessed = (int(x_packed.size) * 2 + (total // pack) * pw * 4
                      + param_bytes + int(gmat.size) * 4)
    cost = pl.CostEstimate(flops=int(mlp_flops + ln_flops),
                           transcendentals=int(total),
                           bytes_accessed=int(bytes_accessed))

    out_packed = pl.pallas_call(
        functools.partial(_fused_mlp_kernel, n_linear),
        out_shape=jax.ShapeDtypeStruct((total // pack, pw), jnp.float32),
        grid_spec=pltpu.PrefetchScalarGridSpec(
            num_scalar_prefetch=1,
            grid=(num_blocks,),
            in_specs=[x_spec, g_spec] + param_specs,
            out_specs=out_spec,
        ),
        compiler_params=pltpu.CompilerParams(
            dimension_semantics=("parallel",),
            vmem_limit_bytes=vmem_limit,
        ),
        cost_estimate=cost,
    )(set_ids, x_packed, gmat, *flat_params)

    out = out_packed.reshape(total, width)            # free row-major reshape

    # Slice each set's (unpadded) rows back out.
    results, off = [], 0
    for f in features:
        r = f.shape[0]
        results.append(out[off:off + r])
        off += _round_up(r, tile)
    return results


# ----------------------------------------------------------------------------
# Parameter construction (torch-style init) and encoder.
# ----------------------------------------------------------------------------
def make_mlp_params(key, input_size, widths):
    """Linear: U(-1/sqrt(fan_in), 1/sqrt(fan_in)); LayerNorm: weight=1, bias=0."""
    dims = [input_size] + list(widths)
    w_list, b_list = [], []
    for i in range(len(dims) - 1):
        key, k_w, k_b = jax.random.split(key, 3)
        bound = float(dims[i]) ** -0.5
        w_list.append(jax.random.uniform(
            k_w, (dims[i], dims[i + 1]), jnp.float32, -bound, bound))
        b_list.append(jax.random.uniform(
            k_b, (1, dims[i + 1]), jnp.float32, -bound, bound))
    gamma = jnp.ones((1, dims[-1]), jnp.float32)
    beta = jnp.zeros((1, dims[-1]), jnp.float32)
    return (w_list, b_list, gamma, beta), key


def _block_diag_pack(w, pack):
    return w if pack == 1 else block_diag(*([w] * pack))


class GraphNetEncoderPallas:
    """JAX/Pallas equivalent of the PyTorch GraphNetEncoder forward pass."""

    def __init__(self, node_input_dim, edge_input_dims, latent_size,
                 num_edge_sets, num_layers, key):
        widths = [latent_size] * num_layers + [latent_size]
        self.width = latent_size
        self.n_linear = len(widths)

        # Pack P logical rows per lane-dense physical row; fill the MXU width
        # of the current generation (256 lanes on v6e/v7x, 128 on v5e/older).
        lanes = _mxu_lane_width()
        if latent_size <= lanes and lanes % latent_size == 0:
            self.pack = lanes // latent_size
        elif latent_size <= 128 and 128 % latent_size == 0:
            self.pack = 128 // latent_size
        else:
            self.pack = 1

        in_dims = [node_input_dim] + list(edge_input_dims)
        self.dp = max(in_dims)

        self.per_set_params = []                      # set 0 = nodes, 1.. = edges
        for d_in in in_dims:
            p, key = make_mlp_params(key, d_in, widths)
            self.per_set_params.append(p)

        # Stack + block-diagonalize the per-set params once, at init.
        flat = []
        for l in range(self.n_linear):
            w_stack, b_stack = [], []
            for (w_list, b_list, _, _) in self.per_set_params:
                w = w_list[l]
                if l == 0 and w.shape[0] < self.dp:   # zero-pad input dim
                    w = jnp.zeros((self.dp, w.shape[1]),
                                  w.dtype).at[:w.shape[0]].set(w)
                w_stack.append(
                    _block_diag_pack(w, self.pack).astype(jnp.bfloat16))
                b_stack.append(jnp.tile(b_list[l], (1, self.pack)))
            flat.append(jnp.stack(w_stack))           # (S, pack*K_l, pack*width)
            flat.append(jnp.stack(b_stack))           # (S, 1, pack*width)
        flat.append(jnp.stack([jnp.tile(g, (1, self.pack))
                               for (_, _, g, _) in self.per_set_params]))
        flat.append(jnp.stack([jnp.tile(b, (1, self.pack))
                               for (_, _, _, b) in self.per_set_params]))
        self.flat_params = flat

        # Group-averaging matrix for packed LayerNorm stats (built once).
        pw = self.pack * latent_size
        lane = jnp.arange(pw)
        self.gmat = ((lane[:, None] // latent_size)
                     == (lane[None, :] // latent_size)
                     ).astype(jnp.float32) / float(latent_size)

    def __call__(self, node_features, edge_sets, *, tile_rows=4096):
        feats = [node_features] + [es["features"] for es in edge_sets]
        outs = _fused_mlp_forward(
            feats, self.flat_params, self.gmat,
            n_linear=self.n_linear, pack=self.pack, width=self.width,
            dp=self.dp, tile_rows=tile_rows)
        new_edge_sets = [
            {"features": outs[i + 1],
             "senders": es["senders"],
             "receivers": es["receivers"]}
            for i, es in enumerate(edge_sets)]
        return outs[0], new_edge_sets


if __name__ == "__main__":
    key = jax.random.PRNGKey(0)

    node_input_dim = 12
    edge_input_dims = [7, 5]
    latent_size = 32
    num_edge_sets = 2
    num_layers = 2

    num_nodes = 64
    num_edges = [128, 64]

    key, k_n, k_e0, k_e1, k_s0, k_r0, k_s1, k_r1, k_p = jax.random.split(key, 9)
    node_features = jax.random.normal(k_n, (num_nodes, node_input_dim),
                                      jnp.float32)
    edge_sets = [
        {
            "features": jax.random.normal(
                k_e0, (num_edges[0], edge_input_dims[0]), jnp.float32),
            "senders": jax.random.randint(
                k_s0, (num_edges[0],), 0, num_nodes, jnp.int32),
            "receivers": jax.random.randint(
                k_r0, (num_edges[0],), 0, num_nodes, jnp.int32),
        },
        {
            "features": jax.random.normal(
                k_e1, (num_edges[1], edge_input_dims[1]), jnp.float32),
            "senders": jax.random.randint(
                k_s1, (num_edges[1],), 0, num_nodes, jnp.int32),
            "receivers": jax.random.randint(
                k_r1, (num_edges[1],), 0, num_nodes, jnp.int32),
        },
    ]

    encoder = GraphNetEncoderPallas(node_input_dim, edge_input_dims,
                                    latent_size, num_edge_sets, num_layers,
                                    k_p)

    new_nodes, new_edge_sets = encoder(node_features, edge_sets)
    jax.block_until_ready(new_nodes)
    for es in new_edge_sets:
        jax.block_until_ready(es["features"])

    # Plain-JAX reference mirroring the kernel's bf16 dot operands / f32 accum.
    def ref_mlp(x, params):
        w_list, b_list, gamma, beta = params
        h = x.astype(jnp.bfloat16)
        n = len(w_list)
        a = None
        for i in range(n):
            a = jnp.dot(h, w_list[i].astype(jnp.bfloat16),
                        preferred_element_type=jnp.float32) + b_list[i]
            if i < n - 1:
                a = jnp.maximum(a, 0.0)
                h = a.astype(jnp.bfloat16)
        mean = jnp.mean(a, axis=-1, keepdims=True)
        var = jnp.mean((a - mean) ** 2, axis=-1, keepdims=True)
        return (a - mean) * jax.lax.rsqrt(var + 1e-5) * gamma + beta

    ref_nodes = ref_mlp(node_features, encoder.per_set_params[0])
    assert jnp.allclose(new_nodes, ref_nodes, atol=2e-3, rtol=2e-3), \
        float(jnp.max(jnp.abs(new_nodes - ref_nodes)))
    for i in range(num_edge_sets):
        ref_e = ref_mlp(edge_sets[i]["features"], encoder.per_set_params[i + 1])
        assert jnp.allclose(new_edge_sets[i]["features"], ref_e,
                            atol=2e-3, rtol=2e-3), \
            float(jnp.max(jnp.abs(new_edge_sets[i]["features"] - ref_e)))

    assert new_nodes.shape == (num_nodes, latent_size)
    assert new_edge_sets[0]["features"].shape == (num_edges[0], latent_size)
    assert new_edge_sets[1]["features"].shape == (num_edges[1], latent_size)

    print("KERNEL_OK")
</pallas_src>

<mosaic_0001>
module attributes {stable_mosaic.version = 11 : i64} {
  func.func @_fused_mlp_kernel(%arg0: i32, %arg1: memref<3xi32, #tpu.memory_space<smem>>, %arg2: memref<32x48xbf16, #tpu.memory_space<vmem>>, %arg3: memref<128x128xf32, #tpu.memory_space<vmem>>, %arg4: memref<1x48x128xbf16, #tpu.memory_space<vmem>>, %arg5: memref<1x1x128xf32, #tpu.memory_space<vmem>>, %arg6: memref<1x128x128xbf16, #tpu.memory_space<vmem>>, %arg7: memref<1x1x128xf32, #tpu.memory_space<vmem>>, %arg8: memref<1x128x128xbf16, #tpu.memory_space<vmem>>, %arg9: memref<1x1x128xf32, #tpu.memory_space<vmem>>, %arg10: memref<1x1x128xf32, #tpu.memory_space<vmem>>, %arg11: memref<1x1x128xf32, #tpu.memory_space<vmem>>, %arg12: memref<32x128xf32, #tpu.memory_space<vmem>>) attributes {dimension_semantics = [#tpu.dimension_semantics<parallel>], iteration_bounds = array<i64: 3>, scalar_prefetch = 1 : i64, scratch_operands = 0 : i64, tpu.core_type = #tpu.core_type<tc>, window_params = [{transform_indices = @transform_0, window_bounds = array<i64: 32, 48>}, {pipeline_mode = #tpu.pipeline_mode<synchronous>, transform_indices = @transform_1, window_bounds = array<i64: 128, 128>}, {transform_indices = @transform_2, window_bounds = array<i64: 1, 48, 128>}, {transform_indices = @transform_3, window_bounds = array<i64: 1, 1, 128>}, {transform_indices = @transform_4, window_bounds = array<i64: 1, 128, 128>}, {transform_indices = @transform_5, window_bounds = array<i64: 1, 1, 128>}, {transform_indices = @transform_6, window_bounds = array<i64: 1, 128, 128>}, {transform_indices = @transform_7, window_bounds = array<i64: 1, 1, 128>}, {transform_indices = @transform_8, window_bounds = array<i64: 1, 1, 128>}, {transform_indices = @transform_9, window_bounds = array<i64: 1, 1, 128>}, {transform_indices = @transform_10, window_bounds = array<i64: 32, 128>}]} {
    %c0 = arith.constant 0 : index
    %c0_0 = arith.constant 0 : index
    %0 = vector.load %arg2[%c0, %c0_0] : memref<32x48xbf16, #tpu.memory_space<vmem>>, vector<32x48xbf16>
    %c0_1 = arith.constant 0 : index
    %c0_2 = arith.constant 0 : index
    %c0_3 = arith.constant 0 : index
    %1 = vector.load %arg4[%c0_1, %c0_2, %c0_3] : memref<1x48x128xbf16, #tpu.memory_space<vmem>>, vector<1x48x128xbf16>
    %2 = vector.shape_cast %1 : vector<1x48x128xbf16> to vector<48x128xbf16>
    %c0_4 = arith.constant 0 : index
    %c0_5 = arith.constant 0 : index
    %c0_6 = arith.constant 0 : index
    %3 = vector.load %arg5[%c0_4, %c0_5, %c0_6] : memref<1x1x128xf32, #tpu.memory_space<vmem>>, vector<1x1x128xf32>
    %4 = vector.shape_cast %3 : vector<1x1x128xf32> to vector<1x128xf32>
    %cst = arith.constant dense<0.000000e+00> : vector<32x128xf32>
    %5 = tpu.matmul %0, %2, %cst {dimension_numbers = #tpu.dot_dimension_numbers<[1], [0], [0], [1], [0, 0, 1, 1], [], []>} : vector<32x48xbf16>, vector<48x128xbf16>, vector<32x128xf32> -> vector<32x128xf32>
    %6 = vector.broadcast %4 : vector<1x128xf32> to vector<32x128xf32>
    %7 = arith.addf %5, %6 : vector<32x128xf32>
    %cst_7 = arith.constant 0.000000e+00 : f32
    %8 = vector.broadcast %cst_7 : f32 to vector<32x128xf32>
    %9 = arith.maximumf %7, %8 : vector<32x128xf32>
    %10 = arith.truncf %9 : vector<32x128xf32> to vector<32x128xbf16>
    %c0_8 = arith.constant 0 : index
    %c0_9 = arith.constant 0 : index
    %c0_10 = arith.constant 0 : index
    %11 = vector.load %arg6[%c0_8, %c0_9, %c0_10] : memref<1x128x128xbf16, #tpu.memory_space<vmem>>, vector<1x128x128xbf16>
    %12 = vector.shape_cast %11 : vector<1x128x128xbf16> to vector<128x128xbf16>
    %c0_11 = arith.constant 0 : index
    %c0_12 = arith.constant 0 : index
    %c0_13 = arith.constant 0 : index
    %13 = vector.load %arg7[%c0_11, %c0_12, %c0_13] : memref<1x1x128xf32, #tpu.memory_space<vmem>>, vector<1x1x128xf32>
    %14 = vector.shape_cast %13 : vector<1x1x128xf32> to vector<1x128xf32>
    %cst_14 = arith.constant dense<0.000000e+00> : vector<32x128xf32>
    %15 = tpu.matmul %10, %12, %cst_14 {dimension_numbers = #tpu.dot_dimension_numbers<[1], [0], [0], [1], [0, 0, 1, 1], [], []>} : vector<32x128xbf16>, vector<128x128xbf16>, vector<32x128xf32> -> vector<32x128xf32>
    %16 = vector.broadcast %14 : vector<1x128xf32> to vector<32x128xf32>
    %17 = arith.addf %15, %16 : vector<32x128xf32>
    %cst_15 = arith.constant 0.000000e+00 : f32
    %18 = vector.broadcast %cst_15 : f32 to vector<32x128xf32>
    %19 = arith.maximumf %17, %18 : vector<32x128xf32>
    %20 = arith.truncf %19 : vector<32x128xf32> to vector<32x128xbf16>
    %c0_16 = arith.constant 0 : index
    %c0_17 = arith.constant 0 : index
    %c0_18 = arith.constant 0 : index
    %21 = vector.load %arg8[%c0_16, %c0_17, %c0_18] : memref<1x128x128xbf16, #tpu.memory_space<vmem>>, vector<1x128x128xbf16>
    %22 = vector.shape_cast %21 : vector<1x128x128xbf16> to vector<128x128xbf16>
    %c0_19 = arith.constant 0 : index
    %c0_20 = arith.constant 0 : index
    %c0_21 = arith.constant 0 : index
    %23 = vector.load %arg9[%c0_19, %c0_20, %c0_21] : memref<1x1x128xf32, #tpu.memory_space<vmem>>, vector<1x1x128xf32>
    %24 = vector.shape_cast %23 : vector<1x1x128xf32> to vector<1x128xf32>
    %cst_22 = arith.constant dense<0.000000e+00> : vector<32x128xf32>
    %25 = tpu.matmul %20, %22, %cst_22 {dimension_numbers = #tpu.dot_dimension_numbers<[1], [0], [0], [1], [0, 0, 1, 1], [], []>} : vector<32x128xbf16>, vector<128x128xbf16>, vector<32x128xf32> -> vector<32x128xf32>
    %26 = vector.broadcast %24 : vector<1x128xf32> to vector<32x128xf32>
    %27 = arith.addf %25, %26 : vector<32x128xf32>
    %c0_23 = arith.constant 0 : index
    %c0_24 = arith.constant 0 : index
    %c0_25 = arith.constant 0 : index
    %28 = vector.load %arg10[%c0_23, %c0_24, %c0_25] : memref<1x1x128xf32, #tpu.memory_space<vmem>>, vector<1x1x128xf32>
    %29 = vector.shape_cast %28 : vector<1x1x128xf32> to vector<1x128xf32>
    %c0_26 = arith.constant 0 : index
    %c0_27 = arith.constant 0 : index
    %c0_28 = arith.constant 0 : index
    %30 = vector.load %arg11[%c0_26, %c0_27, %c0_28] : memref<1x1x128xf32, #tpu.memory_space<vmem>>, vector<1x1x128xf32>
    %31 = vector.shape_cast %30 : vector<1x1x128xf32> to vector<1x128xf32>
    %c0_29 = arith.constant 0 : index
    %c0_30 = arith.constant 0 : index
    %32 = vector.load %arg3[%c0_29, %c0_30] : memref<128x128xf32, #tpu.memory_space<vmem>>, vector<128x128xf32>
    %cst_31 = arith.constant dense<0.000000e+00> : vector<32x128xf32>
    %33 = tpu.matmul %27, %32, %cst_31 {dimension_numbers = #tpu.dot_dimension_numbers<[1], [0], [0], [1], [0, 0, 1, 1], [], []>} : vector<32x128xf32>, vector<128x128xf32>, vector<32x128xf32> -> vector<32x128xf32>
    %34 = arith.subf %27, %33 : vector<32x128xf32>
    %35 = arith.mulf %34, %34 : vector<32x128xf32>
    %cst_32 = arith.constant dense<0.000000e+00> : vector<32x128xf32>
    %36 = tpu.matmul %35, %32, %cst_32 {dimension_numbers = #tpu.dot_dimension_numbers<[1], [0], [0], [1], [0, 0, 1, 1], [], []>} : vector<32x128xf32>, vector<128x128xf32>, vector<32x128xf32> -> vector<32x128xf32>
    %cst_33 = arith.constant 9.99999974E-6 : f32
    %37 = vector.broadcast %cst_33 : f32 to vector<32x128xf32>
    %38 = arith.addf %36, %37 : vector<32x128xf32>
    %39 = math.rsqrt %38 : vector<32x128xf32>
    %40 = arith.mulf %34, %39 : vector<32x128xf32>
    %41 = vector.broadcast %29 : vector<1x128xf32> to vector<32x128xf32>
    %42 = arith.mulf %40, %41 : vector<32x128xf32>
    %43 = vector.broadcast %31 : vector<1x128xf32> to vector<32x128xf32>
    %44 = arith.addf %42, %43 : vector<32x128xf32>
    %c0_34 = arith.constant 0 : index
    %c0_35 = arith.constant 0 : index
    %45 = vector.load %arg12[%c0_34, %c0_35] : memref<32x128xf32, #tpu.memory_space<vmem>>, vector<32x128xf32>
    tpu.vector_store %arg12[%c0_34, %c0_35], %44 {strides = array<i32>} : memref<32x128xf32, #tpu.memory_space<vmem>>, vector<32x128xf32>,
    return
  }
  func.func @transform_0(%arg0: i32, %arg1: memref<3xi32, #tpu.memory_space<smem>>) -> (i32, i32) {
    %c0_i32 = arith.constant 0 : i32
    %c0_i32_0 = arith.constant 0 : i32
    return %arg0, %c0_i32 : i32, i32
  }
  func.func @transform_1(%arg0: i32, %arg1: memref<3xi32, #tpu.memory_space<smem>>) -> (i32, i32) {
    %c0_i32 = arith.constant 0 : i32
    %c0_i32_0 = arith.constant 0 : i32
    %c0_i32_1 = arith.constant 0 : i32
    return %c0_i32, %c0_i32_0 : i32, i32
  }
  func.func @transform_2(%arg0: i32, %arg1: memref<3xi32, #tpu.memory_space<smem>>) -> (i32, i32, i32) {
    %0 = arith.index_cast %arg0 : i32 to index
    %1 = memref.load %arg1[%0] : memref<3xi32, #tpu.memory_space<smem>>
    %c0_i32 = arith.constant 0 : i32
    %c0_i32_0 = arith.constant 0 : i32
    %c0_i32_1 = arith.constant 0 : i32
    return %1, %c0_i32, %c0_i32_0 : i32, i32, i32
  }
  func.func @transform_3(%arg0: i32, %arg1: memref<3xi32, #tpu.memory_space<smem>>) -> (i32, i32, i32) {
    %0 = arith.index_cast %arg0 : i32 to index
    %1 = memref.load %arg1[%0] : memref<3xi32, #tpu.memory_space<smem>>
    %c0_i32 = arith.constant 0 : i32
    %c0_i32_0 = arith.constant 0 : i32
    %c0_i32_1 = arith.constant 0 : i32
    return %1, %c0_i32, %c0_i32_0 : i32, i32, i32
  }
  func.func @transform_4(%arg0: i32, %arg1: memref<3xi32, #tpu.memory_space<smem>>) -> (i32, i32, i32) {
    %0 = arith.index_cast %arg0 : i32 to index
    %1 = memref.load %arg1[%0] : memref<3xi32, #tpu.memory_space<smem>>
    %c0_i32 = arith.constant 0 : i32
    %c0_i32_0 = arith.constant 0 : i32
    %c0_i32_1 = arith.constant 0 : i32
    return %1, %c0_i32, %c0_i32_0 : i32, i32, i32
  }
  func.func @transform_5(%arg0: i32, %arg1: memref<3xi32, #tpu.memory_space<smem>>) -> (i32, i32, i32) {
    %0 = arith.index_cast %arg0 : i32 to index
    %1 = memref.load %arg1[%0] : memref<3xi32, #tpu.memory_space<smem>>
    %c0_i32 = arith.constant 0 : i32
    %c0_i32_0 = arith.constant 0 : i32
    %c0_i32_1 = arith.constant 0 : i32
    return %1, %c0_i32, %c0_i32_0 : i32, i32, i32
  }
  func.func @transform_6(%arg0: i32, %arg1: memref<3xi32, #tpu.memory_space<smem>>) -> (i32, i32, i32) {
    %0 = arith.index_cast %arg0 : i32 to index
    %1 = memref.load %arg1[%0] : memref<3xi32, #tpu.memory_space<smem>>
    %c0_i32 = arith.constant 0 : i32
    %c0_i32_0 = arith.constant 0 : i32
    %c0_i32_1 = arith.constant 0 : i32
    return %1, %c0_i32, %c0_i32_0 : i32, i32, i32
  }
  func.func @transform_7(%arg0: i32, %arg1: memref<3xi32, #tpu.memory_space<smem>>) -> (i32, i32, i32) {
    %0 = arith.index_cast %arg0 : i32 to index
    %1 = memref.load %arg1[%0] : memref<3xi32, #tpu.memory_space<smem>>
    %c0_i32 = arith.constant 0 : i32
    %c0_i32_0 = arith.constant 0 : i32
    %c0_i32_1 = arith.constant 0 : i32
    return %1, %c0_i32, %c0_i32_0 : i32, i32, i32
  }
  func.func @transform_8(%arg0: i32, %arg1: memref<3xi32, #tpu.memory_space<smem>>) -> (i32, i32, i32) {
    %0 = arith.index_cast %arg0 : i32 to index
    %1 = memref.load %arg1[%0] : memref<3xi32, #tpu.memory_space<smem>>
    %c0_i32 = arith.constant 0 : i32
    %c0_i32_0 = arith.constant 0 : i32
    %c0_i32_1 = arith.constant 0 : i32
    return %1, %c0_i32, %c0_i32_0 : i32, i32, i32
  }
  func.func @transform_9(%arg0: i32, %arg1: memref<3xi32, #tpu.memory_space<smem>>) -> (i32, i32, i32) {
    %0 = arith.index_cast %arg0 : i32 to index
    %1 = memref.load %arg1[%0] : memref<3xi32, #tpu.memory_space<smem>>
    %c0_i32 = arith.constant 0 : i32
    %c0_i32_0 = arith.constant 0 : i32
    %c0_i32_1 = arith.constant 0 : i32
    return %1, %c0_i32, %c0_i32_0 : i32, i32, i32
  }
  func.func @transform_10(%arg0: i32, %arg1: memref<3xi32, #tpu.memory_space<smem>>) -> (i32, i32) {
    %c0_i32 = arith.constant 0 : i32
    %c0_i32_0 = arith.constant 0 : i32
    return %arg0, %c0_i32 : i32, i32
  }
}

</mosaic_0001>

<llo_original>
// kernel: _fused_mlp_forward.1
$region0: #{_fused_mlp_forward.1}
  #allocation0 [shape = 'u32[]', space=smem, size = 0x4, offset = 0x4, fixed_abs, tag = 'smem constant byte address 0x4 - core index']
  #allocation1 [shape = 'u32[144,128]{1,0:T(1,128)}', space=vmem, size = 0x12000, scoped, tag = 'internal scratch']
  #allocation2 [shape = 's32[1]{0}', space=sflag, size = 0x4, scoped, tag = 'scoped memory for _fused_mlp_forward.1']
  #allocation3 [shape = 'u8[512]{0}', space=smem, size = 0x200, scoped, tag = 'prefetched SMEM operand 0']
  %s0 = inlined_call_operand.vmem [shape: s32[3], index: 0, kind: input, shape index: {}]
  %s1 = inlined_call_operand.vmem [shape: bf16[96,48], index: 1, kind: input, shape index: {}]
  %s2 = inlined_call_operand.vmem [shape: f32[128,128], index: 2, kind: input, shape index: {}]
  %s3 = inlined_call_operand.hbm [shape: bf16[3,48,128], index: 3, kind: input, shape index: {}]
  %s4 = inlined_call_operand.vmem [shape: f32[3,1,128], index: 4, kind: input, shape index: {}]
  %s5 = inlined_call_operand.vmem [shape: bf16[3,128,128], index: 5, kind: input, shape index: {}]
  %s6 = inlined_call_operand.vmem [shape: f32[3,1,128], index: 6, kind: input, shape index: {}]
  %s7 = inlined_call_operand.vmem [shape: bf16[3,128,128], index: 7, kind: input, shape index: {}]
  %s8 = inlined_call_operand.vmem [shape: f32[3,1,128], index: 8, kind: input, shape index: {}]
  %s9 = inlined_call_operand.vmem [shape: f32[3,1,128], index: 9, kind: input, shape index: {}]
  %s10 = inlined_call_operand.vmem [shape: f32[3,1,128], index: 10, kind: input, shape index: {}]
  %s11 = inlined_call_operand.vmem [shape: f32[96,128], index: 11, kind: output, shape index: {}]
  %s12 = sld [smem:[#allocation0]]
  $region77: #{_fused_mlp_forward.1} parent=0
    _
  %s14 = ssub.s32 1, %s12
  %s15 = scalar_select 0, %s14, %s12
  %s16 = sshll.u32 %s0, 4
  %s17 = int_to_ptr.vmem [resolvable:$true] %s16
  %19 = dma.vmem_to_smem %s17, 16, [#allocation3], [#allocation2]
  %20 = dma.done [#allocation2], 16
  %21 = sfence
  $region1: #{_fused_mlp_forward.1} parent=0
    #allocation4 [shape = 'u8[24576]{0}', space=vmem, size = 0x6000, scoped, tag = 'input window, operand 3']
    #allocation5 [shape = 's32[2]{0}', space=sflag, size = 0x8, scoped, tag = 'scoped memory for _fused_mlp_forward.1']
    %22 = vsyncpa [#allocation5], 0
    %s23 = scalar_lea.sflag [#allocation5], 1
    %24 = vsyncpa %s23, 0
    loop: start=0, step=1, limit=5
    $region2: #{_fused_mlp_forward.1} parent=1 // loop_pre_header
      _
    $region3: #{_fused_mlp_forward.1} parent=1 // loop_header
      %s26 = sphi 0, %s30
      %p27 = scmp.ge.s32.totalorder %s26, 5
      %s36 = sphi 0, %s38
      %s39 = sphi 0, %s36
      %s40 = sphi 0, %s39
      %s56 = sphi 0, %s40
      %s60 = sphi 0, %s60
      %s62 = sphi 0, %s60
      %s63 = sphi 0, %s62
      %s77 = sphi 0, %s63
      %s85 = sphi 0, %s87
      %s88 = sphi 0, %s85
      %s89 = sphi 0, %s88
      %s105 = sphi 0, %s89
      %s113 = sphi 0, %s115
      %s116 = sphi 0, %s113
      %s117 = sphi 0, %s116
      %s133 = sphi 0, %s117
      %s141 = sphi 0, %s143
      %s144 = sphi 0, %s141
      %s145 = sphi 0, %s144
      %s161 = sphi 0, %s145
      %s169 = sphi 0, %s171
      %s172 = sphi 0, %s169
      %s173 = sphi 0, %s172
      %s189 = sphi 0, %s173
      %s197 = sphi 0, %s199
      %s200 = sphi 0, %s197
      %s201 = sphi 0, %s200
      %s217 = sphi 0, %s201
      %s225 = sphi 0, %s227
      %s228 = sphi 0, %s225
      %s229 = sphi 0, %s228
      %s245 = sphi 0, %s229
      %s253 = sphi 0, %s255
      %s256 = sphi 0, %s253
      %s257 = sphi 0, %s256
      %s273 = sphi 0, %s257
      %s281 = sphi 0, %s283
      %s284 = sphi 0, %s281
      %s285 = sphi 0, %s284
      %s301 = sphi 0, %s285
      %s307 = sphi 0, %s309
      %s310 = sphi 0, %s307
      %s311 = sphi 0, %s310
      %s327 = sphi 0, %s311
    $region4: #{_fused_mlp_forward.1} parent=1 // loop_header_branch
      %29 = sbr.rel (%p27) target = $region8
    $region5: #{_fused_mlp_forward.1} parent=1 // loop_body
      %s31 = ssub.s32 %s26, 1
      %s32 = ssub.s32 %s26, 2
      %s33 = sadd.s32 %s26, 1
      %s34 = ssub.s32 %s26, %s33
      %p35 = scmp.eq.s32.totalorder %s34, 0
      %s37 = sadd.s32 %s36, 1
      %s38 = scalar_select %p35, %s36, %s37
      %p41 = pneg %p35
      %p42 = scmp.eq.s32.totalorder %s26, 2
      %p43 = por %p41, %p42
      %p44 = scmp.ne.s32.totalorder %s36, %s39
      %p45 = scmp.eq.s32.totalorder %s26, 0
      %p46 = por %p44, %p45
      %p47 = scmp.ne.s32.totalorder %s36, %s39
      %p48 = scmp.eq.s32.totalorder %s31, 2
      %p49 = por %p47, %p48
      %p50 = scmp.ne.s32.totalorder %s39, %s40
      %p51 = scmp.eq.s32.totalorder %s31, 0
      %p52 = por %p50, %p51
      %p53 = scmp.ne.s32.totalorder %s39, %s40
      %p54 = scmp.eq.s32.totalorder %s32, 2
      %p55 = por %p53, %p54
      %p57 = scmp.ne.s32.totalorder %s40, %s56
      %p58 = scmp.eq.s32.totalorder %s32, 0
      %p59 = por %p57, %p58
      %s61 = sadd.s32 %s60, 1
      %p64 = scmp.eq.s32.totalorder %s26, 2
      %p65 = scmp.ne.s32.totalorder %s60, %s62
      %p66 = scmp.eq.s32.totalorder %s26, 0
      %p67 = por %p65, %p66
      %p68 = scmp.ne.s32.totalorder %s60, %s62
      %p69 = scmp.eq.s32.totalorder %s31, 2
      %p70 = por %p68, %p69
      %p71 = scmp.ne.s32.totalorder %s62, %s63
      %p72 = scmp.eq.s32.totalorder %s31, 0
      %p73 = por %p71, %p72
      %p74 = scmp.ne.s32.totalorder %s62, %s63
      %p75 = scmp.eq.s32.totalorder %s32, 2
      %p76 = por %p74, %p75
      %p78 = scmp.ne.s32.totalorder %s63, %s77
      %p79 = scmp.eq.s32.totalorder %s32, 0
      %p80 = por %p78, %p79
      %s81 = sld [smem:[#allocation3 + %s26]]
      %s82 = sld [smem:[#allocation3 + %s33]]
      %s83 = ssub.s32 %s81, %s82
      %p84 = scmp.eq.s32.totalorder %s83, 0
      %s86 = sadd.s32 %s85, 1
      %s87 = scalar_select %p84, %s85, %s86
      %p90 = pneg %p84
      %p91 = scmp.eq.s32.totalorder %s26, 2
      %p92 = por %p90, %p91
      %p93 = scmp.ne.s32.totalorder %s85, %s88
      %p94 = scmp.eq.s32.totalorder %s26, 0
      %p95 = por %p93, %p94
      %p96 = scmp.ne.s32.totalorder %s85, %s88
      %p97 = scmp.eq.s32.totalorder %s31, 2
      %p98 = por %p96, %p97
      %p99 = scmp.ne.s32.totalorder %s88, %s89
      %p100 = scmp.eq.s32.totalorder %s31, 0
      %p101 = por %p99, %p100
      %p102 = scmp.ne.s32.totalorder %s88, %s89
      %p103 = scmp.eq.s32.totalorder %s32, 2
      %p104 = por %p102, %p103
      %p106 = scmp.ne.s32.totalorder %s89, %s105
      %p107 = scmp.eq.s32.totalorder %s32, 0
      %p108 = por %p106, %p107
      %s109 = sld [smem:[#allocation3 + %s26]]
      %s110 = sld [smem:[#allocation3 + %s33]]
      %s111 = ssub.s32 %s109, %s110
      %p112 = scmp.eq.s32.totalorder %s111, 0
      %s114 = sadd.s32 %s113, 1
      %s115 = scalar_select %p112, %s113, %s114
      %p118 = pneg %p112
      %p119 = scmp.eq.s32.totalorder %s26, 2
      %p120 = por %p118, %p119
      %p121 = scmp.ne.s32.totalorder %s113, %s116
      %p122 = scmp.eq.s32.totalorder %s26, 0
      %p123 = por %p121, %p122
      %p124 = scmp.ne.s32.totalorder %s113, %s116
      %p125 = scmp.eq.s32.totalorder %s31, 2
      %p126 = por %p124, %p125
      %p127 = scmp.ne.s32.totalorder %s116, %s117
      %p128 = scmp.eq.s32.totalorder %s31, 0
      %p129 = por %p127, %p128
      %p130 = scmp.ne.s32.totalorder %s116, %s117
      %p131 = scmp.eq.s32.totalorder %s32, 2
      %p132 = por %p130, %p131
      %p134 = scmp.ne.s32.totalorder %s117, %s133
      %p135 = scmp.eq.s32.totalorder %s32, 0
      %p136 = por %p134, %p135
      %s137 = sld [smem:[#allocation3 + %s26]]
      %s138 = sld [smem:[#allocation3 + %s33]]
      %s139 = ssub.s32 %s137, %s138
      %p140 = scmp.eq.s32.totalorder %s139, 0
      %s142 = sadd.s32 %s141, 1
      %s143 = scalar_select %p140, %s141, %s142
      %p146 = pneg %p140
      %p147 = scmp.eq.s32.totalorder %s26, 2
      %p148 = por %p146, %p147
      %p149 = scmp.ne.s32.totalorder %s141, %s144
      %p150 = scmp.eq.s32.totalorder %s26, 0
      %p151 = por %p149, %p150
      %p152 = scmp.ne.s32.totalorder %s141, %s144
      %p153 = scmp.eq.s32.totalorder %s31, 2
      %p154 = por %p152, %p153
      %p155 = scmp.ne.s32.totalorder %s144, %s145
      %p156 = scmp.eq.s32.totalorder %s31, 0
      %p157 = por %p155, %p156
      %p158 = scmp.ne.s32.totalorder %s144, %s145
      %p159 = scmp.eq.s32.totalorder %s32, 2
      %p160 = por %p158, %p159
      %p162 = scmp.ne.s32.totalorder %s145, %s161
      %p163 = scmp.eq.s32.totalorder %s32, 0
      %p164 = por %p162, %p163
      %s165 = sld [smem:[#allocation3 + %s26]]
      %s166 = sld [smem:[#allocation3 + %s33]]
      %s167 = ssub.s32 %s165, %s166
      %p168 = scmp.eq.s32.totalorder %s167, 0
      %s170 = sadd.s32 %s169, 1
      %s171 = scalar_select %p168, %s169, %s170
      %p174 = pneg %p168
      %p175 = scmp.eq.s32.totalorder %s26, 2
      %p176 = por %p174, %p175
      %p177 = scmp.ne.s32.totalorder %s169, %s172
      %p178 = scmp.eq.s32.totalorder %s26, 0
      %p179 = por %p177, %p178
      %p180 = scmp.ne.s32.totalorder %s169, %s172
      %p181 = scmp.eq.s32.totalorder %s31, 2
      %p182 = por %p180, %p181
      %p183 = scmp.ne.s32.totalorder %s172, %s173
      %p184 = scmp.eq.s32.totalorder %s31, 0
      %p185 = por %p183, %p184
      %p186 = scmp.ne.s32.totalorder %s172, %s173
      %p187 = scmp.eq.s32.totalorder %s32, 2
      %p188 = por %p186, %p187
      %p190 = scmp.ne.s32.totalorder %s173, %s189
      %p191 = scmp.eq.s32.totalorder %s32, 0
      %p192 = por %p190, %p191
      %s193 = sld [smem:[#allocation3 + %s26]]
      %s194 = sld [smem:[#allocation3 + %s33]]
      %s195 = ssub.s32 %s193, %s194
      %p196 = scmp.eq.s32.totalorder %s195, 0
      %s198 = sadd.s32 %s197, 1
      %s199 = scalar_select %p196, %s197, %s198
      %p202 = pneg %p196
      %p203 = scmp.eq.s32.totalorder %s26, 2
      %p204 = por %p202, %p203
      %p205 = scmp.ne.s32.totalorder %s197, %s200
      %p206 = scmp.eq.s32.totalorder %s26, 0
      %p207 = por %p205, %p206
      %p208 = scmp.ne.s32.totalorder %s197, %s200
      %p209 = scmp.eq.s32.totalorder %s31, 2
      %p210 = por %p208, %p209
      %p211 = scmp.ne.s32.totalorder %s200, %s201
      %p212 = scmp.eq.s32.totalorder %s31, 0
      %p213 = por %p211, %p212
      %p214 = scmp.ne.s32.totalorder %s200, %s201
      %p215 = scmp.eq.s32.totalorder %s32, 2
      %p216 = por %p214, %p215
      %p218 = scmp.ne.s32.totalorder %s201, %s217
      %p219 = scmp.eq.s32.totalorder %s32, 0
      %p220 = por %p218, %p219
      %s221 = sld [smem:[#allocation3 + %s26]]
      %s222 = sld [smem:[#allocation3 + %s33]]
      %s223 = ssub.s32 %s221, %s222
      %p224 = scmp.eq.s32.totalorder %s223, 0
      %s226 = sadd.s32 %s225, 1
      %s227 = scalar_select %p224, %s225, %s226
      %p230 = pneg %p224
      %p231 = scmp.eq.s32.totalorder %s26, 2
      %p232 = por %p230, %p231
      %p233 = scmp.ne.s32.totalorder %s225, %s228
      %p234 = scmp.eq.s32.totalorder %s26, 0
      %p235 = por %p233, %p234
      %p236 = scmp.ne.s32.totalorder %s225, %s228
      %p237 = scmp.eq.s32.totalorder %s31, 2
      %p238 = por %p236, %p237
      %p239 = scmp.ne.s32.totalorder %s228, %s229
      %p240 = scmp.eq.s32.totalorder %s31, 0
      %p241 = por %p239, %p240
      %p242 = scmp.ne.s32.totalorder %s228, %s229
      %p243 = scmp.eq.s32.totalorder %s32, 2
      %p244 = por %p242, %p243
      %p246 = scmp.ne.s32.totalorder %s229, %s245
      %p247 = scmp.eq.s32.totalorder %s32, 0
      %p248 = por %p246, %p247
      %s249 = sld [smem:[#allocation3 + %s26]]
      %s250 = sld [smem:[#allocation3 + %s33]]
      %s251 = ssub.s32 %s249, %s250
      %p252 = scmp.eq.s32.totalorder %s251, 0
      %s254 = sadd.s32 %s253, 1
      %s255 = scalar_select %p252, %s253, %s254
      %p258 = pneg %p252
      %p259 = scmp.eq.s32.totalorder %s26, 2
      %p260 = por %p258, %p259
      %p261 = scmp.ne.s32.totalorder %s253, %s256
      %p262 = scmp.eq.s32.totalorder %s26, 0
      %p263 = por %p261, %p262
      %p264 = scmp.ne.s32.totalorder %s253, %s256
      %p265 = scmp.eq.s32.totalorder %s31, 2
      %p266 = por %p264, %p265
      %p267 = scmp.ne.s32.totalorder %s256, %s257
      %p268 = scmp.eq.s32.totalorder %s31, 0
      %p269 = por %p267, %p268
      %p270 = scmp.ne.s32.totalorder %s256, %s257
      %p271 = scmp.eq.s32.totalorder %s32, 2
      %p272 = por %p270, %p271
      %p274 = scmp.ne.s32.totalorder %s257, %s273
      %p275 = scmp.eq.s32.totalorder %s32, 0
      %p276 = por %p274, %p275
      %s277 = sld [smem:[#allocation3 + %s26]]
      %s278 = sld [smem:[#allocation3 + %s33]]
      %s279 = ssub.s32 %s277, %s278
      %p280 = scmp.eq.s32.totalorder %s279, 0
      %s282 = sadd.s32 %s281, 1
      %s283 = scalar_select %p280, %s281, %s282
      %p286 = pneg %p280
      %p287 = scmp.eq.s32.totalorder %s26, 2
      %p288 = por %p286, %p287
      %p289 = scmp.ne.s32.totalorder %s281, %s284
      %p290 = scmp.eq.s32.totalorder %s26, 0
      %p291 = por %p289, %p290
      %p292 = scmp.ne.s32.totalorder %s281, %s284
      %p293 = scmp.eq.s32.totalorder %s31, 2
      %p294 = por %p292, %p293
      %p295 = scmp.ne.s32.totalorder %s284, %s285
      %p296 = scmp.eq.s32.totalorder %s31, 0
      %p297 = por %p295, %p296
      %p298 = scmp.ne.s32.totalorder %s284, %s285
      %p299 = scmp.eq.s32.totalorder %s32, 2
      %p300 = por %p298, %p299
      %p302 = scmp.ne.s32.totalorder %s285, %s301
      %p303 = scmp.eq.s32.totalorder %s32, 0
      %p304 = por %p302, %p303
      %s305 = ssub.s32 %s26, %s33
      %p306 = scmp.eq.s32.totalorder %s305, 0
      %s308 = sadd.s32 %s307, 1
      %s309 = scalar_select %p306, %s307, %s308
      %p312 = pneg %p306
      %p313 = scmp.eq.s32.totalorder %s26, 2
      %p314 = por %p312, %p313
      %p315 = scmp.ne.s32.totalorder %s307, %s310
      %p316 = scmp.eq.s32.totalorder %s26, 0
      %p317 = por %p315, %p316
      %p318 = scmp.ne.s32.totalorder %s307, %s310
      %p319 = scmp.eq.s32.totalorder %s31, 2
      %p320 = por %p318, %p319
      %p321 = scmp.ne.s32.totalorder %s310, %s311
      %p322 = scmp.eq.s32.totalorder %s31, 0
      %p323 = por %p321, %p322
      %p324 = scmp.ne.s32.totalorder %s310, %s311
      %p325 = scmp.eq.s32.totalorder %s32, 2
      %p326 = por %p324, %p325
      %p328 = scmp.ne.s32.totalorder %s311, %s327
      %p329 = scmp.eq.s32.totalorder %s32, 0
      %p330 = por %p328, %p329
      %p331 = scmp.le.s32.totalorder 1, %s26
      %p332 = scmp.lt.s32.totalorder %s26, 4
      %p333 = pnand %p331, %p332
      %p334 = pneg %p333
      // Predicated region
      $region9: #{_fused_mlp_forward.1} parent=5 // pred_check
        _
      $region10: #{_fused_mlp_forward.1} parent=5 // pred_check_branch
        %336 = sbr.rel (%p333) target = $region12
      $region11: #{_fused_mlp_forward.1} parent=5 // pred_region
        %s337 = ssub.s32 %s26, 1
        // Predicated region
        $region13: #{_fused_mlp_forward.1} parent=11 // pred_check
          %p338 = pneg %p73
        $region14: #{_fused_mlp_forward.1} parent=11 // pred_check_branch
          %340 = sbr.rel (%p338) target = $region16
        $region15: #{_fused_mlp_forward.1} parent=11 // pred_region
          _
        $region16: #{_fused_mlp_forward.1} parent=11 // pred_fallthru
          _
      $region12: #{_fused_mlp_forward.1} parent=5 // pred_fallthru
        _
      %p341 = scmp.lt.s32.totalorder %s26, 3
      // Predicated region
      $region17: #{_fused_mlp_forward.1} parent=5 // pred_check
        %p342 = pneg %p341
      $region18: #{_fused_mlp_forward.1} parent=5 // pred_check_branch
        %344 = sbr.rel (%p342) target = $region20
      $region19: #{_fused_mlp_forward.1} parent=5 // pred_region
        // Predicated region
        $region21: #{_fused_mlp_forward.1} parent=19 // pred_check
          %p345 = pneg %p46
        $region22: #{_fused_mlp_forward.1} parent=19 // pred_check_branch
          %347 = sbr.rel (%p345) target = $region24
        $region23: #{_fused_mlp_forward.1} parent=19 // pred_region
          %s348 = smul.u32 4, %s26
          %p349 = scmp.lt.s32.totalorder %s348, 11
          %s350 = scalar_select %p349, %s348, 11
          %s351 = smul.addr %s350, 4
          %s352 = scalar_lea.vmem %s1, %s351
          %s353 = smul.u32 4, %s26
        $region24: #{_fused_mlp_forward.1} parent=19 // pred_fallthru
          _
        // Predicated region
        $region25: #{_fused_mlp_forward.1} parent=19 // pred_check
          %p354 = pneg %p95
        $region26: #{_fused_mlp_forward.1} parent=19 // pred_check_branch
          %356 = sbr.rel (%p354) target = $region28
        $region27: #{_fused_mlp_forward.1} parent=19 // pred_region
          %s357 = sand.u32 %s85, 1
          %s358 = scalar_lea.sflag [#allocation5], %s357
          %s359 = sand.u32 %s85, 1
          %s360 = smul.addr %s359, 24
          %s361 = scalar_lea.vmem [#allocation4], %s360
          %s362 = sld [smem:[#allocation3 + %s26]]
          %s364 = ssub.s32 384, 384
          %365 = vsyncadd %s358, %s364
          %s366 = smul.addr %s362, 6
          %s367 = smul.addr %s366, 64
          %s368 = scalar_lea.hbm %s3, %s367
          %s369 = sshll.u32 %s361, 4
          %s370 = int_to_ptr.vmem [resolvable:$true] %s369
          %375 = dma.hbm_to_vmem [thread:$0]  %s368, 384, %s370, %s358, 64, 64, 4
        $region28: #{_fused_mlp_forward.1} parent=19 // pred_fallthru
          _
        // Predicated region
        $region29: #{_fused_mlp_forward.1} parent=19 // pred_check
          %p376 = pneg %p123
        $region30: #{_fused_mlp_forward.1} parent=19 // pred_check_branch
          %378 = sbr.rel (%p376) target = $region32
        $region31: #{_fused_mlp_forward.1} parent=19 // pred_region
          %s379 = sld [smem:[#allocation3 + %s26]]
          %p380 = scmp.lt.s32.totalorder %s379, 2
          %s381 = scalar_select %p380, %s379, 2
          %s382 = scalar_lea.vmem %s4, %s381
          %s383 = sld [smem:[#allocation3 + %s26]]
        $region32: #{_fused_mlp_forward.1} parent=19 // pred_fallthru
          _
        // Predicated region
        $region33: #{_fused_mlp_forward.1} parent=19 // pred_check
          %p384 = pneg %p151
        $region34: #{_fused_mlp_forward.1} parent=19 // pred_check_branch
          %386 = sbr.rel (%p384) target = $region36
        $region35: #{_fused_mlp_forward.1} parent=19 // pred_region
          %s387 = sld [smem:[#allocation3 + %s26]]
          %p388 = scmp.lt.s32.totalorder %s387, 2
          %s389 = scalar_select %p388, %s387, 2
          %s390 = smul.addr %s389, 16
          %s391 = smul.addr %s390, 4
          %s392 = scalar_lea.vmem %s5, %s391
          %s393 = sld [smem:[#allocation3 + %s26]]
        $region36: #{_fused_mlp_forward.1} parent=19 // pred_fallthru
          _
        // Predicated region
        $region37: #{_fused_mlp_forward.1} parent=19 // pred_check
          %p394 = pneg %p179
        $region38: #{_fused_mlp_forward.1} parent=19 // pred_check_branch
          %396 = sbr.rel (%p394) target = $region40
        $region39: #{_fused_mlp_forward.1} parent=19 // pred_region
          %s397 = sld [smem:[#allocation3 + %s26]]
          %p398 = scmp.lt.s32.totalorder %s397, 2
          %s399 = scalar_select %p398, %s397, 2
          %s400 = scalar_lea.vmem %s6, %s399
          %s401 = sld [smem:[#allocation3 + %s26]]
        $region40: #{_fused_mlp_forward.1} parent=19 // pred_fallthru
          _
        // Predicated region
        $region41: #{_fused_mlp_forward.1} parent=19 // pred_check
          %p402 = pneg %p207
        $region42: #{_fused_mlp_forward.1} parent=19 // pred_check_branch
          %404 = sbr.rel (%p402) target = $region44
        $region43: #{_fused_mlp_forward.1} parent=19 // pred_region
          %s405 = sld [smem:[#allocation3 + %s26]]
          %p406 = scmp.lt.s32.totalorder %s405, 2
          %s407 = scalar_select %p406, %s405, 2
          %s408 = smul.addr %s407, 16
          %s409 = smul.addr %s408, 4
          %s410 = scalar_lea.vmem %s7, %s409
          %s411 = sld [smem:[#allocation3 + %s26]]
        $region44: #{_fused_mlp_forward.1} parent=19 // pred_fallthru
          _
        // Predicated region
        $region45: #{_fused_mlp_forward.1} parent=19 // pred_check
          %p412 = pneg %p235
        $region46: #{_fused_mlp_forward.1} parent=19 // pred_check_branch
          %414 = sbr.rel (%p412) target = $region48
        $region47: #{_fused_mlp_forward.1} parent=19 // pred_region
          %s415 = sld [smem:[#allocation3 + %s26]]
          %p416 = scmp.lt.s32.totalorder %s415, 2
          %s417 = scalar_select %p416, %s415, 2
          %s418 = scalar_lea.vmem %s8, %s417
          %s419 = sld [smem:[#allocation3 + %s26]]
        $region48: #{_fused_mlp_forward.1} parent=19 // pred_fallthru
          _
        // Predicated region
        $region49: #{_fused_mlp_forward.1} parent=19 // pred_check
          %p420 = pneg %p263
        $region50: #{_fused_mlp_forward.1} parent=19 // pred_check_branch
          %422 = sbr.rel (%p420) target = $region52
        $region51: #{_fused_mlp_forward.1} parent=19 // pred_region
          %s423 = sld [smem:[#allocation3 + %s26]]
          %p424 = scmp.lt.s32.totalorder %s423, 2
          %s425 = scalar_select %p424, %s423, 2
          %s426 = scalar_lea.vmem %s9, %s425
          %s427 = sld [smem:[#allocation3 + %s26]]
        $region52: #{_fused_mlp_forward.1} parent=19 // pred_fallthru
          _
        // Predicated region
        $region53: #{_fused_mlp_forward.1} parent=19 // pred_check
          %p428 = pneg %p291
        $region54: #{_fused_mlp_forward.1} parent=19 // pred_check_branch
          %430 = sbr.rel (%p428) target = $region56
        $region55: #{_fused_mlp_forward.1} parent=19 // pred_region
          %s431 = sld [smem:[#allocation3 + %s26]]
          %p432 = scmp.lt.s32.totalorder %s431, 2
          %s433 = scalar_select %p432, %s431, 2
          %s434 = scalar_lea.vmem %s10, %s433
          %s435 = sld [smem:[#allocation3 + %s26]]
        $region56: #{_fused_mlp_forward.1} parent=19 // pred_fallthru
          _
      $region20: #{_fused_mlp_forward.1} parent=5 // pred_fallthru
        _
      %p436 = scmp.le.s32.totalorder 1, %s26
      %p437 = scmp.lt.s32.totalorder %s26, 4
      %p438 = pnand %p436, %p437
      %p439 = pneg %p438
      // Predicated region
      $region57: #{_fused_mlp_forward.1} parent=5 // pred_check
        _
      $region58: #{_fused_mlp_forward.1} parent=5 // pred_check_branch
        %441 = sbr.rel (%p438) target = $region60
      $region59: #{_fused_mlp_forward.1} parent=5 // pred_region
        %s442 = ssub.s32 %s26, 1
        %s443 = sand.u32 %s88, 1
        %s444 = scalar_lea.sflag [#allocation5], %s443
        %s445 = sand.u32 %s88, 1
        %s446 = smul.addr %s445, 24
        %s447 = scalar_lea.vmem [#allocation4], %s446
        // Predicated region
        $region61: #{_fused_mlp_forward.1} parent=59 // pred_check
          %p448 = pneg %p101
        $region62: #{_fused_mlp_forward.1} parent=59 // pred_check_branch
          %450 = sbr.rel (%p448) target = $region64
        $region63: #{_fused_mlp_forward.1} parent=59 // pred_region
          %451 = dma.done %s444, 384
        $region64: #{_fused_mlp_forward.1} parent=59 // pred_fallthru
          _
        %s452 = smul.u32 4, %s31
        %p453 = scmp.lt.s32.totalorder %s452, 11
        %s454 = scalar_select %p453, %s452, 11
        %s455 = smul.addr %s454, 4
        %s456 = scalar_lea.vmem %s1, %s455
        %p457 = pneg %p52
        %p458 = pneg %p49
        %p459 = pneg %p73
        %p460 = pneg %p70
        %s461 = sand.u32 %s88, 1
        %s462 = scalar_lea.sflag [#allocation5], %s461
        %s463 = sand.u32 %s88, 1
        %s464 = smul.addr %s463, 24
        %s465 = scalar_lea.vmem [#allocation4], %s464
        %p466 = pneg %p101
        %p467 = pneg %p98
        %s468 = sld [smem:[#allocation3 + %s31]]
        %p469 = scmp.lt.s32.totalorder %s468, 2
        %s470 = scalar_select %p469, %s468, 2
        %s471 = scalar_lea.vmem %s4, %s470
        %p472 = pneg %p129
        %p473 = pneg %p126
        %s474 = sld [smem:[#allocation3 + %s31]]
        %p475 = scmp.lt.s32.totalorder %s474, 2
        %s476 = scalar_select %p475, %s474, 2
        %s477 = smul.addr %s476, 16
        %s478 = smul.addr %s477, 4
        %s479 = scalar_lea.vmem %s5, %s478
        %p480 = pneg %p157
        %p481 = pneg %p154
        %s482 = sld [smem:[#allocation3 + %s31]]
        %p483 = scmp.lt.s32.totalorder %s482, 2
        %s484 = scalar_select %p483, %s482, 2
        %s485 = scalar_lea.vmem %s6, %s484
        %p486 = pneg %p185
        %p487 = pneg %p182
        %s488 = sld [smem:[#allocation3 + %s31]]
        %p489 = scmp.lt.s32.totalorder %s488, 2
        %s490 = scalar_select %p489, %s488, 2
        %s491 = smul.addr %s490, 16
        %s492 = smul.addr %s491, 4
        %s493 = scalar_lea.vmem %s7, %s492
        %p494 = pneg %p213
        %p495 = pneg %p210
        %s496 = sld [smem:[#allocation3 + %s31]]
        %p497 = scmp.lt.s32.totalorder %s496, 2
        %s498 = scalar_select %p497, %s496, 2
        %s499 = scalar_lea.vmem %s8, %s498
        %p500 = pneg %p241
        %p501 = pneg %p238
        %s502 = sld [smem:[#allocation3 + %s31]]
        %p503 = scmp.lt.s32.totalorder %s502, 2
        %s504 = scalar_select %p503, %s502, 2
        %s505 = scalar_lea.vmem %s9, %s504
        %p506 = pneg %p269
        %p507 = pneg %p266
        %s508 = sld [smem:[#allocation3 + %s31]]
        %p509 = scmp.lt.s32.totalorder %s508, 2
        %s510 = scalar_select %p509, %s508, 2
        %s511 = scalar_lea.vmem %s10, %s510
        %p512 = pneg %p297
        %p513 = pneg %p294
        %p514 = pneg %p323
        %p515 = pneg %p320
        %s516 = smul.u32 4, %s31
        %p517 = scmp.lt.s32.totalorder %s516, 11
        %s518 = scalar_select %p517, %s516, 11
        %s519 = smul.addr %s518, 8
        %s520 = scalar_lea.vmem %s11, %s519
        %s521 = smul.u32 4, %s31
        %p522 = scmp.lt.s32.totalorder %s521, 11
        %s523 = scalar_select %p522, %s521, 11
        %s524 = smul.addr %s523, 4
        %s525 = scalar_lea.vmem %s1, %s524
        %s526 = smul.u32 4, %s31
        %s527 = sld [smem:[#allocation3 + %s31]]
        %s528 = sld [smem:[#allocation3 + %s31]]
        %p529 = scmp.lt.s32.totalorder %s528, 2
        %s530 = scalar_select %p529, %s528, 2
        %s531 = scalar_lea.vmem %s4, %s530
        %s532 = sld [smem:[#allocation3 + %s31]]
        %s533 = sld [smem:[#allocation3 + %s31]]
        %p534 = scmp.lt.s32.totalorder %s533, 2
        %s535 = scalar_select %p534, %s533, 2
        %s536 = smul.addr %s535, 16
        %s537 = smul.addr %s536, 4
        %s538 = scalar_lea.vmem %s5, %s537
        %s539 = sld [smem:[#allocation3 + %s31]]
        %s540 = sld [smem:[#allocation3 + %s31]]
        %p541 = scmp.lt.s32.totalorder %s540, 2
        %s542 = scalar_select %p541, %s540, 2
        %s543 = scalar_lea.vmem %s6, %s542
        %s544 = sld [smem:[#allocation3 + %s31]]
        %s545 = sld [smem:[#allocation3 + %s31]]
        %p546 = scmp.lt.s32.totalorder %s545, 2
        %s547 = scalar_select %p546, %s545, 2
        %s548 = smul.addr %s547, 16
        %s549 = smul.addr %s548, 4
        %s550 = scalar_lea.vmem %s7, %s549
        %s551 = sld [smem:[#allocation3 + %s31]]
        %s552 = sld [smem:[#allocation3 + %s31]]
        %p553 = scmp.lt.s32.totalorder %s552, 2
        %s554 = scalar_select %p553, %s552, 2
        %s555 = scalar_lea.vmem %s8, %s554
        %s556 = sld [smem:[#allocation3 + %s31]]
        %s557 = sld [smem:[#allocation3 + %s31]]
        %p558 = scmp.lt.s32.totalorder %s557, 2
        %s559 = scalar_select %p558, %s557, 2
        %s560 = scalar_lea.vmem %s9, %s559
        %s561 = sld [smem:[#allocation3 + %s31]]
        %s562 = sld [smem:[#allocation3 + %s31]]
        %p563 = scmp.lt.s32.totalorder %s562, 2
        %s564 = scalar_select %p563, %s562, 2
        %s565 = scalar_lea.vmem %s10, %s564
        %s566 = sld [smem:[#allocation3 + %s31]]
        %s567 = smul.u32 4, %s31
        %p568 = scmp.lt.s32.totalorder %s567, 11
        %s569 = scalar_select %p568, %s567, 11
        %s570 = smul.addr %s569, 8
        %s571 = scalar_lea.vmem %s11, %s570
        %s572 = smul.u32 4, %s31
        %v574 = vld [vmem:[%s525] sm:$0xf]
        %v575 = vld [vmem:[%s525 + $0x4] sm:$0xf]
        %v576 = vld [vmem:[%s525 + $0x8] sm:$0xf]
        %v577 = vld [vmem:[%s525 + $0xc] sm:$0xf]
        %v578 = vld [vmem:[%s447] sm:$0xf]
        %v579 = vld [vmem:[%s447 + $0x4] sm:$0xf]
        %v580 = vld [vmem:[%s447 + $0x8] sm:$0xf]
        %v581 = vld [vmem:[%s447 + $0xc] sm:$0xf]
        %v582 = vld [vmem:[%s447 + $0x10] sm:$0xf]
        %v583 = vld [vmem:[%s447 + $0x14] sm:$0xf]
        %v584 = vld [vmem:[%s531] sm:$0x1]
        %v586 = vlaneseq
        %v587 = vshrl.u32 %v586, 7
        %v588 = vsub.s32 0, %v587
        %v589 = vrot.slane %v584, %v588
        %v595 = vunpack.c.l.b16 %v574
        %v596 = vunpack.c.l.b16 %v575
        %v597 = vunpack.c.l.b16 %v576
        %v598 = vunpack.c.l.b16 %v577
        %v599 = vpack.c.b16 %v596, %v595
        %v600 = vpack.c.b16 %v598, %v597
        %v607 = vunpack.c.l.b16 %v578
        %v608 = vunpack.c.l.b16 %v579
        %v609 = vunpack.c.l.b16 %v580
        %v610 = vunpack.c.l.b16 %v581
        %v611 = vunpack.c.l.b16 %v582
        %v612 = vunpack.c.l.b16 %v583
        %v613 = vpack.c.b16 %v608, %v607
        %v614 = vpack.c.b16 %v610, %v609
        %v615 = vpack.c.b16 %v612, %v611
        %vm619 = vcmask 392192
        %v621 = vsel %vm619, %v599, 0
        %v624 = vsel %vm619, %v600, 0
        %626 = vmatprep.subr.bf16.mxu0 0
        %627 = vmatpush1.bf16.msra.mxu0 %v613
        %628 = vmatprep.subr.bf16.mxu0 0
        %629 = vmatpush1.bf16.msra.mxu0 %v614
        %630 = vmatprep.subr.bf16.mxu0 0
        %631 = vmatpush1.bf16.msra.mxu0 %v615
        %632 = vmatprep.subr.bf16.mxu0 0
        %633 = vmatpush1.bf16.msra.mxu0 0
        %634 = vmatprep.subr.bf16.mxu0 0
        %635 = vmatpush1.bf16.msra.mxu0 0
        %636 = vmatprep.subr.bf16.mxu0 0
        %637 = vmatpush1.bf16.msra.mxu0 0
        %638 = vmatprep.subr.bf16.mxu0 0
        %639 = vmatpush1.bf16.msra.mxu0 0
        %640 = vmatprep.subr.bf16.mxu0 0
        %641 = vmatpush1.bf16.msra.mxu0 0
        %642 = vmatprep.subr.bf16.mxu0 0
        %643 = vmatpush1.bf16.msra.mxu0 0
        %644 = vmatprep.subr.bf16.mxu0 0
        %645 = vmatpush1.bf16.msra.mxu0 0
        %646 = vmatprep.subr.bf16.mxu0 0
        %647 = vmatpush1.bf16.msra.mxu0 0
        %648 = vmatprep.subr.bf16.mxu0 0
        %649 = vmatpush1.bf16.msra.mxu0 0
        %650 = vmatprep.subr.bf16.mxu0 0
        %651 = vmatpush1.bf16.msra.mxu0 0
        %652 = vmatprep.subr.bf16.mxu0 0
        %653 = vmatpush1.bf16.msra.mxu0 0
        %654 = vmatprep.subr.bf16.mxu0 0
        %655 = vmatpush1.bf16.msra.mxu0 0
        %656 = vmatprep.subr.bf16.mxu0 0
        %657 = vmatpush1.bf16.msra.mxu0 0
        %658 = vmatprep.mubr.bf16.mxu0 0
        %659 = vmatmul.mubr.bf16.gmra.mrb[0].mxu0 %v621
        %v660 = vpop.f32.mrb[0].mxu0
        %v661 = vadd.f32 %v589, %v660
        %v662 = vpop.f32.mrb[0].mxu0
        %v663 = vpop.f32.mrb[0].mxu0
        %v664 = vadd.f32 %v589, %v663
        %v665 = vpop.f32.mrb[0].mxu0
        %666 = vmatprep.mubr.bf16.mxu0 0
        %667 = vmatmul.mubr.bf16.gmra.mrb[0].mxu0 %v624
        %v668 = vpop.f32.mrb[0].mxu0
        %v669 = vadd.f32 %v589, %v668
        %v670 = vpop.f32.mrb[0].mxu0
        %v671 = vpop.f32.mrb[0].mxu0
        %v672 = vadd.f32 %v589, %v671
        %v673 = vpop.f32.mrb[0].mxu0
        %674 = vdwg.mxu0
        %v675 = vmax.f32 %v661, 0.0
        %v676 = vmax.f32 %v664, 0.0
        %v677 = vmax.f32 %v669, 0.0
        %v678 = vmax.f32 %v672, 0.0
        %v679 = vpack.c.bf16 %v676, %v675
        %v680 = vpack.c.bf16 %v678, %v677
        %v681 = vld [vmem:[%s538] sm:$0xf]
        %v682 = vld [vmem:[%s538 + $0x4] sm:$0xf]
        %v683 = vld [vmem:[%s538 + $0x8] sm:$0xf]
        %v684 = vld [vmem:[%s538 + $0xc] sm:$0xf]
        %v685 = vld [vmem:[%s538 + $0x10] sm:$0xf]
        %v686 = vld [vmem:[%s538 + $0x14] sm:$0xf]
        %v687 = vld [vmem:[%s538 + $0x18] sm:$0xf]
        %v688 = vld [vmem:[%s538 + $0x1c] sm:$0xf]
        %v689 = vld [vmem:[%s538 + $0x20] sm:$0xf]
        %v690 = vld [vmem:[%s538 + $0x24] sm:$0xf]
        %v691 = vld [vmem:[%s538 + $0x28] sm:$0xf]
        %v692 = vld [vmem:[%s538 + $0x2c] sm:$0xf]
        %v693 = vld [vmem:[%s538 + $0x30] sm:$0xf]
        %v694 = vld [vmem:[%s538 + $0x34] sm:$0xf]
        %v695 = vld [vmem:[%s538 + $0x38] sm:$0xf]
        %v696 = vld [vmem:[%s538 + $0x3c] sm:$0xf]
        %v697 = vld [vmem:[%s543] sm:$0x1]
        %v699 = vlaneseq
        %v700 = vshrl.u32 %v699, 7
        %v701 = vsub.s32 0, %v700
        %v702 = vrot.slane %v697, %v701
        %v720 = vunpack.c.l.b16 %v681
        %v721 = vunpack.c.l.b16 %v682
        %v722 = vunpack.c.l.b16 %v683
        %v723 = vunpack.c.l.b16 %v684
        %v724 = vunpack.c.l.b16 %v685
        %v725 = vunpack.c.l.b16 %v686
        %v726 = vunpack.c.l.b16 %v687
        %v727 = vunpack.c.l.b16 %v688
        %v728 = vunpack.c.l.b16 %v689
        %v729 = vunpack.c.l.b16 %v690
        %v730 = vunpack.c.l.b16 %v691
        %v731 = vunpack.c.l.b16 %v692
        %v732 = vunpack.c.l.b16 %v693
        %v733 = vunpack.c.l.b16 %v694
        %v734 = vunpack.c.l.b16 %v695
        %v735 = vunpack.c.l.b16 %v696
        %v736 = vpack.c.b16 %v721, %v720
        %v737 = vpack.c.b16 %v723, %v722
        %v738 = vpack.c.b16 %v725, %v724
        %v739 = vpack.c.b16 %v727, %v726
        %v740 = vpack.c.b16 %v729, %v728
        %v741 = vpack.c.b16 %v731, %v730
        %v742 = vpack.c.b16 %v733, %v732
        %v743 = vpack.c.b16 %v735, %v734
        %752 = vmatprep.subr.bf16.mxu0 0
        %753 = vmatpush1.bf16.msra.mxu0 %v736
        %754 = vmatprep.subr.bf16.mxu0 0
        %755 = vmatpush1.bf16.msra.mxu0 %v737
        %756 = vmatprep.subr.bf16.mxu0 0
        %757 = vmatpush1.bf16.msra.mxu0 %v738
        %758 = vmatprep.subr.bf16.mxu0 0
        %759 = vmatpush1.bf16.msra.mxu0 %v739
        %760 = vmatprep.subr.bf16.mxu0 0
        %761 = vmatpush1.bf16.msra.mxu0 %v740
        %762 = vmatprep.subr.bf16.mxu0 0
        %763 = vmatpush1.bf16.msra.mxu0 %v741
        %764 = vmatprep.subr.bf16.mxu0 0
        %765 = vmatpush1.bf16.msra.mxu0 %v742
        %766 = vmatprep.subr.bf16.mxu0 0
        %767 = vmatpush1.bf16.msra.mxu0 %v743
        %768 = vmatprep.subr.bf16.mxu0 0
        %769 = vmatpush1.bf16.msra.mxu0 0
        %770 = vmatprep.subr.bf16.mxu0 0
        %771 = vmatpush1.bf16.msra.mxu0 0
        %772 = vmatprep.subr.bf16.mxu0 0
        %773 = vmatpush1.bf16.msra.mxu0 0
        %774 = vmatprep.subr.bf16.mxu0 0
        %775 = vmatpush1.bf16.msra.mxu0 0
        %776 = vmatprep.subr.bf16.mxu0 0
        %777 = vmatpush1.bf16.msra.mxu0 0
        %778 = vmatprep.subr.bf16.mxu0 0
        %779 = vmatpush1.bf16.msra.mxu0 0
        %780 = vmatprep.subr.bf16.mxu0 0
        %781 = vmatpush1.bf16.msra.mxu0 0
        %782 = vmatprep.subr.bf16.mxu0 0
        %783 = vmatpush1.bf16.msra.mxu0 0
        %784 = vmatprep.mubr.bf16.mxu0 0
        %785 = vmatmul.mubr.bf16.gmra.mrb[0].mxu0 %v679
        %v786 = vpop.f32.mrb[0].mxu0
        %v787 = vadd.f32 %v702, %v786
        %v788 = vpop.f32.mrb[0].mxu0
        %v789 = vpop.f32.mrb[0].mxu0
        %v790 = vadd.f32 %v702, %v789
        %v791 = vpop.f32.mrb[0].mxu0
        %792 = vmatprep.mubr.bf16.mxu0 0
        %793 = vmatmul.mubr.bf16.gmra.mrb[0].mxu0 %v680
        %v794 = vpop.f32.mrb[0].mxu0
        %v795 = vadd.f32 %v702, %v794
        %v796 = vpop.f32.mrb[0].mxu0
        %v797 = vpop.f32.mrb[0].mxu0
        %v798 = vadd.f32 %v702, %v797
        %v799 = vpop.f32.mrb[0].mxu0
        %800 = vdwg.mxu0
        %v801 = vmax.f32 %v787, 0.0
        %v802 = vmax.f32 %v790, 0.0
        %v803 = vmax.f32 %v795, 0.0
        %v804 = vmax.f32 %v798, 0.0
        %v805 = vpack.c.bf16 %v802, %v801
        %v806 = vpack.c.bf16 %v804, %v803
        %v807 = vld [vmem:[%s550] sm:$0xf]
        %v808 = vld [vmem:[%s550 + $0x4] sm:$0xf]
        %v809 = vld [vmem:[%s550 + $0x8] sm:$0xf]
        %v810 = vld [vmem:[%s550 + $0xc] sm:$0xf]
        %v811 = vld [vmem:[%s550 + $0x10] sm:$0xf]
        %v812 = vld [vmem:[%s550 + $0x14] sm:$0xf]
        %v813 = vld [vmem:[%s550 + $0x18] sm:$0xf]
        %v814 = vld [vmem:[%s550 + $0x1c] sm:$0xf]
        %v815 = vld [vmem:[%s550 + $0x20] sm:$0xf]
        %v816 = vld [vmem:[%s550 + $0x24] sm:$0xf]
        %v817 = vld [vmem:[%s550 + $0x28] sm:$0xf]
        %v818 = vld [vmem:[%s550 + $0x2c] sm:$0xf]
        %v819 = vld [vmem:[%s550 + $0x30] sm:$0xf]
        %v820 = vld [vmem:[%s550 + $0x34] sm:$0xf]
        %v821 = vld [vmem:[%s550 + $0x38] sm:$0xf]
        %v822 = vld [vmem:[%s550 + $0x3c] sm:$0xf]
        %v823 = vld [vmem:[%s555] sm:$0x1]
        %v825 = vlaneseq
        %v826 = vshrl.u32 %v825, 7
        %v827 = vsub.s32 0, %v826
        %v828 = vrot.slane %v823, %v827
        %v846 = vunpack.c.l.b16 %v807
        %v847 = vunpack.c.l.b16 %v808
        %v848 = vunpack.c.l.b16 %v809
        %v849 = vunpack.c.l.b16 %v810
        %v850 = vunpack.c.l.b16 %v811
        %v851 = vunpack.c.l.b16 %v812
        %v852 = vunpack.c.l.b16 %v813
        %v853 = vunpack.c.l.b16 %v814
        %v854 = vunpack.c.l.b16 %v815
        %v855 = vunpack.c.l.b16 %v816
        %v856 = vunpack.c.l.b16 %v817
        %v857 = vunpack.c.l.b16 %v818
        %v858 = vunpack.c.l.b16 %v819
        %v859 = vunpack.c.l.b16 %v820
        %v860 = vunpack.c.l.b16 %v821
        %v861 = vunpack.c.l.b16 %v822
        %v862 = vpack.c.b16 %v847, %v846
        %v863 = vpack.c.b16 %v849, %v848
        %v864 = vpack.c.b16 %v851, %v850
        %v865 = vpack.c.b16 %v853, %v852
        %v866 = vpack.c.b16 %v855, %v854
        %v867 = vpack.c.b16 %v857, %v856
        %v868 = vpack.c.b16 %v859, %v858
        %v869 = vpack.c.b16 %v861, %v860
        %878 = vmatprep.subr.bf16.mxu0 0
        %879 = vmatpush1.bf16.msra.mxu0 %v862
        %880 = vmatprep.subr.bf16.mxu0 0
        %881 = vmatpush1.bf16.msra.mxu0 %v863
        %882 = vmatprep.subr.bf16.mxu0 0
        %883 = vmatpush1.bf16.msra.mxu0 %v864
        %884 = vmatprep.subr.bf16.mxu0 0
        %885 = vmatpush1.bf16.msra.mxu0 %v865
        %886 = vmatprep.subr.bf16.mxu0 0
        %887 = vmatpush1.bf16.msra.mxu0 %v866
        %888 = vmatprep.subr.bf16.mxu0 0
        %889 = vmatpush1.bf16.msra.mxu0 %v867
        %890 = vmatprep.subr.bf16.mxu0 0
        %891 = vmatpush1.bf16.msra.mxu0 %v868
        %892 = vmatprep.subr.bf16.mxu0 0
        %893 = vmatpush1.bf16.msra.mxu0 %v869
        %894 = vmatprep.subr.bf16.mxu0 0
        %895 = vmatpush1.bf16.msra.mxu0 0
        %896 = vmatprep.subr.bf16.mxu0 0
        %897 = vmatpush1.bf16.msra.mxu0 0
        %898 = vmatprep.subr.bf16.mxu0 0
        %899 = vmatpush1.bf16.msra.mxu0 0
        %900 = vmatprep.subr.bf16.mxu0 0
        %901 = vmatpush1.bf16.msra.mxu0 0
        %902 = vmatprep.subr.bf16.mxu0 0
        %903 = vmatpush1.bf16.msra.mxu0 0
        %904 = vmatprep.subr.bf16.mxu0 0
        %905 = vmatpush1.bf16.msra.mxu0 0
        %906 = vmatprep.subr.bf16.mxu0 0
        %907 = vmatpush1.bf16.msra.mxu0 0
        %908 = vmatprep.subr.bf16.mxu0 0
        %909 = vmatpush1.bf16.msra.mxu0 0
        %910 = vmatprep.mubr.bf16.mxu0 0
        %911 = vmatmul.mubr.bf16.gmra.mrb[0].mxu0 %v805
        %v912 = vpop.f32.mrb[0].mxu0
        %v913 = vadd.f32 %v828, %v912
        %v914 = vpop.f32.mrb[0].mxu0
        %v915 = vpop.f32.mrb[0].mxu0
        %v916 = vadd.f32 %v828, %v915
        %v917 = vpop.f32.mrb[0].mxu0
        %918 = vmatprep.mubr.bf16.mxu0 0
        %919 = vmatmul.mubr.bf16.gmra.mrb[0].mxu0 %v806
        %v920 = vpop.f32.mrb[0].mxu0
        %v921 = vadd.f32 %v828, %v920
        %v922 = vpop.f32.mrb[0].mxu0
        %v923 = vpop.f32.mrb[0].mxu0
        %v924 = vadd.f32 %v828, %v923
        %v925 = vpop.f32.mrb[0].mxu0
        %926 = vdwg.mxu0
        %v927 = vld [vmem:[%s560] sm:$0x1]
        %v928 = vld [vmem:[%s565] sm:$0x1]
        %v929 = vld [vmem:[%s2] sm:$0xff]
        %v930 = vld [vmem:[%s2 + $0x8] sm:$0xff]
        %v931 = vld [vmem:[%s2 + $0x10] sm:$0xff]
        %v932 = vld [vmem:[%s2 + $0x18] sm:$0xff]
        %v933 = vld [vmem:[%s2 + $0x20] sm:$0xff]
        %v934 = vld [vmem:[%s2 + $0x28] sm:$0xff]
        %v935 = vld [vmem:[%s2 + $0x30] sm:$0xff]
        %v936 = vld [vmem:[%s2 + $0x38] sm:$0xff]
        %v937 = vld [vmem:[%s2 + $0x40] sm:$0xff]
        %v938 = vld [vmem:[%s2 + $0x48] sm:$0xff]
        %v939 = vld [vmem:[%s2 + $0x50] sm:$0xff]
        %v940 = vld [vmem:[%s2 + $0x58] sm:$0xff]
        %v941 = vld [vmem:[%s2 + $0x60] sm:$0xff]
        %v942 = vld [vmem:[%s2 + $0x68] sm:$0xff]
        %v943 = vld [vmem:[%s2 + $0x70] sm:$0xff]
        %v944 = vld [vmem:[%s2 + $0x78] sm:$0xff]
        %945 = vmatprep.subr.mxu0 0.0
        %946 = vmatpush1.msra.mxu0 %v929
        %947 = vmatprep.subr.mxu0 0.0
        %948 = vmatpush1.msra.mxu0 %v930
        %949 = vmatprep.subr.mxu0 0.0
        %950 = vmatpush1.msra.mxu0 %v931
        %951 = vmatprep.subr.mxu0 0.0
        %952 = vmatpush1.msra.mxu0 %v932
        %953 = vmatprep.subr.mxu0 0.0
        %954 = vmatpush1.msra.mxu0 %v933
        %955 = vmatprep.subr.mxu0 0.0
        %956 = vmatpush1.msra.mxu0 %v934
        %957 = vmatprep.subr.mxu0 0.0
        %958 = vmatpush1.msra.mxu0 %v935
        %959 = vmatprep.subr.mxu0 0.0
        %960 = vmatpush1.msra.mxu0 %v936
        %961 = vmatprep.subr.mxu0 0.0
        %962 = vmatpush1.msra.mxu0 %v937
        %963 = vmatprep.subr.mxu0 0.0
        %964 = vmatpush1.msra.mxu0 %v938
        %965 = vmatprep.subr.mxu0 0.0
        %966 = vmatpush1.msra.mxu0 %v939
        %967 = vmatprep.subr.mxu0 0.0
        %968 = vmatpush1.msra.mxu0 %v940
        %969 = vmatprep.subr.mxu0 0.0
        %970 = vmatpush1.msra.mxu0 %v941
        %971 = vmatprep.subr.mxu0 0.0
        %972 = vmatpush1.msra.mxu0 %v942
        %973 = vmatprep.subr.mxu0 0.0
        %974 = vmatpush1.msra.mxu0 %v943
        %975 = vmatprep.subr.mxu0 0.0
        %976 = vmatpush1.msra.mxu0 %v944
        %977 = vmatprep.subr.mxu0 0.0
        %978 = vmatpush1.msra.mxu0 0.0
        %979 = vmatprep.subr.mxu0 0.0
        %980 = vmatpush1.msra.mxu0 0.0
        %981 = vmatprep.subr.mxu0 0.0
        %982 = vmatpush1.msra.mxu0 0.0
        %983 = vmatprep.subr.mxu0 0.0
        %984 = vmatpush1.msra.mxu0 0.0
        %985 = vmatprep.subr.mxu0 0.0
        %986 = vmatpush1.msra.mxu0 0.0
        %987 = vmatprep.subr.mxu0 0.0
        %988 = vmatpush1.msra.mxu0 0.0
        %989 = vmatprep.subr.mxu0 0.0
        %990 = vmatpush1.msra.mxu0 0.0
        %991 = vmatprep.subr.mxu0 0.0
        %992 = vmatpush1.msra.mxu0 0.0
        %993 = vmatprep.subr.mxu0 0.0
        %994 = vmatpush1.msra.mxu0 0.0
        %995 = vmatprep.subr.mxu0 0.0
        %996 = vmatpush1.msra.mxu0 0.0
        %997 = vmatprep.subr.mxu0 0.0
        %998 = vmatpush1.msra.mxu0 0.0
        %999 = vmatprep.subr.mxu0 0.0
        %1000 = vmatpush1.msra.mxu0 0.0
        %1001 = vmatprep.subr.mxu0 0.0
        %1002 = vmatpush1.msra.mxu0 0.0
        %1003 = vmatprep.subr.mxu0 0.0
        %1004 = vmatpush1.msra.mxu0 0.0
        %1005 = vmatprep.subr.mxu0 0.0
        %1006 = vmatpush1.msra.mxu0 0.0
        %1007 = vmatprep.subr.mxu0 0.0
        %1008 = vmatpush1.msra.mxu0 0.0
        %1009 = vmatprep.mubr.f32.mxu0 0.0
        %1010 = vmatmul.mubr.f32.gmra.mrb[0].mxu0 %v913
        %v1011 = vpop.f32.mrb[0].mxu0
        %v1012 = vadd.f32 0.0, %v1011
        %v1013 = vpop.f32.mrb[0].mxu0
        %1014 = vmatprep.mubr.f32.mxu0 0.0
        %1015 = vmatmul.mubr.f32.gmra.mrb[0].mxu0 %v916
        %v1016 = vpop.f32.mrb[0].mxu0
        %v1017 = vadd.f32 0.0, %v1016
        %v1018 = vpop.f32.mrb[0].mxu0
        %1019 = vmatprep.mubr.f32.mxu0 0.0
        %1020 = vmatmul.mubr.f32.gmra.mrb[0].mxu0 %v921
        %v1021 = vpop.f32.mrb[0].mxu0
        %v1022 = vadd.f32 0.0, %v1021
        %v1023 = vpop.f32.mrb[0].mxu0
        %1024 = vmatprep.mubr.f32.mxu0 0.0
        %1025 = vmatmul.mubr.f32.gmra.mrb[0].mxu0 %v924
        %v1026 = vpop.f32.mrb[0].mxu0
        %v1027 = vadd.f32 0.0, %v1026
        %v1028 = vpop.f32.mrb[0].mxu0
        %1029 = vdwg.mxu0
        %v1030 = vsub.f32 %v913, %v1012
        %v1031 = vsub.f32 %v916, %v1017
        %v1032 = vsub.f32 %v921, %v1022
        %v1033 = vsub.f32 %v924, %v1027
        %v1034 = vmul.f32 %v1030, %v1030
        %v1035 = vmul.f32 %v1031, %v1031
        %v1036 = vmul.f32 %v1032, %v1032
        %v1037 = vmul.f32 %v1033, %v1033
        %1038 = vmatprep.subr.mxu0 0.0
        %1039 = vmatpush1.msra.mxu0 %v929
        %1040 = vmatprep.subr.mxu0 0.0
        %1041 = vmatpush1.msra.mxu0 %v930
        %1042 = vmatprep.subr.mxu0 0.0
        %1043 = vmatpush1.msra.mxu0 %v931
        %1044 = vmatprep.subr.mxu0 0.0
        %1045 = vmatpush1.msra.mxu0 %v932
        %1046 = vmatprep.subr.mxu0 0.0
        %1047 = vmatpush1.msra.mxu0 %v933
        %1048 = vmatprep.subr.mxu0 0.0
        %1049 = vmatpush1.msra.mxu0 %v934
        %1050 = vmatprep.subr.mxu0 0.0
        %1051 = vmatpush1.msra.mxu0 %v935
        %1052 = vmatprep.subr.mxu0 0.0
        %1053 = vmatpush1.msra.mxu0 %v936
        %1054 = vmatprep.subr.mxu0 0.0
        %1055 = vmatpush1.msra.mxu0 %v937
        %1056 = vmatprep.subr.mxu0 0.0
        %1057 = vmatpush1.msra.mxu0 %v938
        %1058 = vmatprep.subr.mxu0 0.0
        %1059 = vmatpush1.msra.mxu0 %v939
        %1060 = vmatprep.subr.mxu0 0.0
        %1061 = vmatpush1.msra.mxu0 %v940
        %1062 = vmatprep.subr.mxu0 0.0
        %1063 = vmatpush1.msra.mxu0 %v941
        %1064 = vmatprep.subr.mxu0 0.0
        %1065 = vmatpush1.msra.mxu0 %v942
        %1066 = vmatprep.subr.mxu0 0.0
        %1067 = vmatpush1.msra.mxu0 %v943
        %1068 = vmatprep.subr.mxu0 0.0
        %1069 = vmatpush1.msra.mxu0 %v944
        %1070 = vmatprep.subr.mxu0 0.0
        %1071 = vmatpush1.msra.mxu0 0.0
        %1072 = vmatprep.subr.mxu0 0.0
        %1073 = vmatpush1.msra.mxu0 0.0
        %1074 = vmatprep.subr.mxu0 0.0
        %1075 = vmatpush1.msra.mxu0 0.0
        %1076 = vmatprep.subr.mxu0 0.0
        %1077 = vmatpush1.msra.mxu0 0.0
        %1078 = vmatprep.subr.mxu0 0.0
        %1079 = vmatpush1.msra.mxu0 0.0
        %1080 = vmatprep.subr.mxu0 0.0
        %1081 = vmatpush1.msra.mxu0 0.0
        %1082 = vmatprep.subr.mxu0 0.0
        %1083 = vmatpush1.msra.mxu0 0.0
        %1084 = vmatprep.subr.mxu0 0.0
        %1085 = vmatpush1.msra.mxu0 0.0
        %1086 = vmatprep.subr.mxu0 0.0
        %1087 = vmatpush1.msra.mxu0 0.0
        %1088 = vmatprep.subr.mxu0 0.0
        %1089 = vmatpush1.msra.mxu0 0.0
        %1090 = vmatprep.subr.mxu0 0.0
        %1091 = vmatpush1.msra.mxu0 0.0
        %1092 = vmatprep.subr.mxu0 0.0
        %1093 = vmatpush1.msra.mxu0 0.0
        %1094 = vmatprep.subr.mxu0 0.0
        %1095 = vmatpush1.msra.mxu0 0.0
        %1096 = vmatprep.subr.mxu0 0.0
        %1097 = vmatpush1.msra.mxu0 0.0
        %1098 = vmatprep.subr.mxu0 0.0
        %1099 = vmatpush1.msra.mxu0 0.0
        %1100 = vmatprep.subr.mxu0 0.0
        %1101 = vmatpush1.msra.mxu0 0.0
        %1102 = vmatprep.mubr.f32.mxu0 0.0
        %1103 = vmatmul.mubr.f32.gmra.mrb[0].mxu0 %v1034
        %v1104 = vpop.f32.mrb[0].mxu0
        %v1105 = vadd.f32 1e-05, %v1104
        %v1106 = vpop.f32.mrb[0].mxu0
        %1107 = vmatprep.mubr.f32.mxu0 0.0
        %1108 = vmatmul.mubr.f32.gmra.mrb[0].mxu0 %v1035
        %v1109 = vpop.f32.mrb[0].mxu0
        %v1110 = vadd.f32 1e-05, %v1109
        %v1111 = vpop.f32.mrb[0].mxu0
        %1112 = vmatprep.mubr.f32.mxu0 0.0
        %1113 = vmatmul.mubr.f32.gmra.mrb[0].mxu0 %v1036
        %v1114 = vpop.f32.mrb[0].mxu0
        %v1115 = vadd.f32 1e-05, %v1114
        %v1116 = vpop.f32.mrb[0].mxu0
        %1117 = vmatprep.mubr.f32.mxu0 0.0
        %1118 = vmatmul.mubr.f32.gmra.mrb[0].mxu0 %v1037
        %v1119 = vpop.f32.mrb[0].mxu0
        %v1120 = vadd.f32 1e-05, %v1119
        %v1121 = vpop.f32.mrb[0].mxu0
        %1122 = vdwg.mxu0
        %v1123 = vrsqrt.pop %v1105
        %v1124 = vrsqrt.pop %v1110
        %v1125 = vrsqrt.pop %v1115
        %v1126 = vrsqrt.pop %v1120
        %v1127 = vmul.f32 %v1030, %v1123
        %v1128 = vmul.f32 %v1031, %v1124
        %v1129 = vmul.f32 %v1032, %v1125
        %v1130 = vmul.f32 %v1033, %v1126
        %v1132 = vlaneseq
        %v1133 = vshrl.u32 %v1132, 7
        %v1134 = vsub.s32 0, %v1133
        %v1135 = vrot.slane %v927, %v1134
        %v1137 = vmul.f32 %v1127, %v1135
        %v1138 = vmul.f32 %v1128, %v1135
        %v1139 = vmul.f32 %v1129, %v1135
        %v1140 = vmul.f32 %v1130, %v1135
        %v1142 = vlaneseq
        %v1143 = vshrl.u32 %v1142, 7
        %v1144 = vsub.s32 0, %v1143
        %v1145 = vrot.slane %v928, %v1144
        %v1147 = vadd.f32 %v1137, %v1145
        %v1148 = vadd.f32 %v1138, %v1145
        %v1149 = vadd.f32 %v1139, %v1145
        %v1150 = vadd.f32 %v1140, %v1145
        %1151 = vst [vmem:[%s571] sm:$0xff] %v1147
        %1152 = vst [vmem:[%s571 + $0x8] sm:$0xff] %v1148
        %1153 = vst [vmem:[%s571 + $0x10] sm:$0xff] %v1149
        %1154 = vst [vmem:[%s571 + $0x18] sm:$0xff] %v1150
        %s1155 = smul.u32 4, %s31
        %p1156 = scmp.lt.s32.totalorder %s1155, 11
        %s1157 = scalar_select %p1156, %s1155, 11
        %s1158 = smul.addr %s1157, 8
        %s1159 = scalar_lea.vmem %s11, %s1158
        // Predicated region
        $region65: #{_fused_mlp_forward.1} parent=59 // pred_check
          %p1160 = pneg %p320
        $region66: #{_fused_mlp_forward.1} parent=59 // pred_check_branch
          %1162 = sbr.rel (%p1160) target = $region68
        $region67: #{_fused_mlp_forward.1} parent=59 // pred_region
          %s1163 = smul.u32 4, %s31
        $region68: #{_fused_mlp_forward.1} parent=59 // pred_fallthru
          _
      $region60: #{_fused_mlp_forward.1} parent=5 // pred_fallthru
        _
      %p1164 = scmp.le.s32.totalorder 2, %s26
      // Predicated region
      $region69: #{_fused_mlp_forward.1} parent=5 // pred_check
        %p1165 = pneg %p1164
      $region70: #{_fused_mlp_forward.1} parent=5 // pred_check_branch
        %1167 = sbr.rel (%p1165) target = $region72
      $region71: #{_fused_mlp_forward.1} parent=5 // pred_region
        %s1168 = ssub.s32 %s26, 2
        // Predicated region
        $region73: #{_fused_mlp_forward.1} parent=71 // pred_check
          %p1169 = pneg %p326
        $region74: #{_fused_mlp_forward.1} parent=71 // pred_check_branch
          %1171 = sbr.rel (%p1169) target = $region76
        $region75: #{_fused_mlp_forward.1} parent=71 // pred_region
          %s1172 = smul.u32 4, %s32
          %p1173 = scmp.lt.s32.totalorder %s1172, 11
          %s1174 = scalar_select %p1173, %s1172, 11
          %s1175 = smul.addr %s1174, 8
          %s1176 = scalar_lea.vmem %s11, %s1175
        $region76: #{_fused_mlp_forward.1} parent=71 // pred_fallthru
          _
      $region72: #{_fused_mlp_forward.1} parent=5 // pred_fallthru
        _
    $region6: #{_fused_mlp_forward.1} parent=1 // loop_footer
      %s30 = sadd.s32 1, %s26
    $region7: #{_fused_mlp_forward.1} parent=1 // loop_footer_branch
      %25 = sbr.rel target = $region3
    $region8: #{_fused_mlp_forward.1} parent=1 // loop_exit
      _
    %1177 = vsyncpa [#allocation5], 1
    %s1178 = scalar_lea.sflag [#allocation5], 1
    %1179 = vsyncpa %s1178, 1

</llo_original>
